<compile_context>
chip_gen: v7x
topology: tpu7x:2x2x1
jax: 0.10.0
libtpu: 0.0.40
codegen_flags: <defaults>
</compile_context>

<pallas_src>
import functools

import jax
import jax.numpy as jnp
from jax.experimental import pallas as pl
from jax.experimental.pallas import tpu as pltpu


# ----------------------------------------------------------------------------
# Fused Pallas kernel: user DNN + server DNN (split-K) + decoders + scores
#                      + dot-with-user + cumulative sum, for one side
#                      (pos or neg) selected by the grid index.
# ----------------------------------------------------------------------------
def _fe_fused_kernel(u_ref, items_ref, duw_ref, dub_ref, dnnw_ref, dnnb_ref,
                     decw_ref, decb_ref, scw_ref, scb_ref, out_ref,
                     *, client_count):
    bf16 = jnp.bfloat16
    f32 = jnp.float32

    # ---- user path: DNN_user(emb_user)[users] == Linear(emb_user[users]) ----
    u = jnp.dot(u_ref[...].astype(bf16), duw_ref[...].astype(bf16),
                preferred_element_type=f32) + dub_ref[...]            # [B, E]

    items = items_ref[0]                                              # [C, B, E]

    # ---- server item path: split-K over the C concatenated table chunks ----
    acc = jnp.dot(items[0].astype(bf16), dnnw_ref[0].astype(bf16),
                  preferred_element_type=f32)
    for c in range(1, client_count):
        acc = acc + jnp.dot(items[c].astype(bf16), dnnw_ref[c].astype(bf16),
                            preferred_element_type=f32)
    server = acc + dnnb_ref[...]                                      # [B, E]

    # ---- per-client decoders (clients 1 .. C-1) ----
    item_list = [server]
    for c in range(1, client_count):
        dec = jnp.dot(items[c].astype(bf16), decw_ref[c - 1].astype(bf16),
                      preferred_element_type=f32) + decb_ref[c - 1]   # [B, E]
        item_list.append(dec)

    # ---- Score_i = sigmoid(Linear_i(.)); dot with user; cumulative sum ----
    cum = jnp.zeros((u.shape[0], 1), f32)
    cum_cols = []
    for c in range(client_count):
        iw = jax.nn.sigmoid(
            jnp.dot(item_list[c].astype(bf16), scw_ref[c].astype(bf16),
                    preferred_element_type=f32) + scb_ref[c])         # [B, E]
        cum = cum + jnp.sum(iw * u, axis=-1, keepdims=True)           # [B, 1]
        cum_cols.append(cum)

    out_ref[0] = jnp.concatenate(cum_cols, axis=1)                    # [B, C]


# ----------------------------------------------------------------------------
# Parameter initialization (deterministic, synthetic)
# ----------------------------------------------------------------------------
def init_params(key, user_count, item_count, emb_size, client_count):
    n_clients = client_count - 1
    n_keys = 4 + 2 * n_clients + 2 * client_count
    keys = iter(jax.random.split(key, n_keys))

    def nrm(k, shape, scale=0.1):
        return (scale * jax.random.normal(k, shape)).astype(jnp.float32)

    params = {
        # embedding tables
        "emb_user": nrm(next(keys), (user_count, emb_size)),
        "emb_item": nrm(next(keys), (item_count, emb_size)),
        "client_item": [nrm(next(keys), (item_count, emb_size))
                        for _ in range(n_clients)],
        # DNN_user: MLP([E, E])
        "dnn_user_w": nrm(next(keys), (emb_size, emb_size)),
        "dnn_user_b": jnp.zeros((emb_size,), jnp.float32),
        # DNN: MLP([E*C, E])
        "dnn_w": nrm(next(keys), (emb_size * client_count, emb_size)),
        "dnn_b": jnp.zeros((emb_size,), jnp.float32),
        # per-client decoders: MLP([E, E])
        "dec_w": [nrm(next(keys), (emb_size, emb_size)) for _ in range(n_clients)],
        "dec_b": [jnp.zeros((emb_size,), jnp.float32) for _ in range(n_clients)],
        # per-model Score(E): Linear(E, E) + Sigmoid
        "score_w": [nrm(next(keys), (emb_size, emb_size)) for _ in range(client_count)],
        "score_b": [jnp.zeros((emb_size,), jnp.float32) for _ in range(client_count)],
    }
    return params


# ----------------------------------------------------------------------------
# FE.forward equivalent (single fused pallas_call)
# ----------------------------------------------------------------------------
@functools.partial(jax.jit, static_argnames=("client_count",))
def fe_forward(params, users, pos_items, neg_items, client_count):
    emb_size = params["emb_user"].shape[1]
    batch = users.shape[0]
    assert client_count >= 2

    # Gather only the B rows the forward actually consumes, BEFORE any linear
    # layer (every item-side layer is row-wise, so Score(f(T))[idx] ==
    # Score(f(T[idx]))).  The tiny 8-row gathers stay in plain JAX; everything
    # else happens inside one kernel.
    tables = jnp.stack([params["emb_item"]] + list(params["client_item"]), 0)  # [C, I, E]
    idx = jnp.stack([pos_items, neg_items], 0)                                  # [2, B]
    items_g = jnp.transpose(jnp.take(tables, idx, axis=1), (1, 0, 2, 3))        # [2, C, B, E]
    u_g = jnp.take(params["emb_user"], users, axis=0)                           # [B, E]

    # Stacked weights (client axis leading) so one kernel handles all clients.
    dnn_user_w = params["dnn_user_w"]
    dnn_user_b = params["dnn_user_b"].reshape(1, emb_size)
    dnn_w = params["dnn_w"].reshape(client_count, emb_size, emb_size)   # split-K chunks
    dnn_b = params["dnn_b"].reshape(1, emb_size)
    dec_w = jnp.stack(params["dec_w"], 0)                               # [C-1, E, E]
    dec_b = jnp.stack(params["dec_b"], 0).reshape(client_count - 1, 1, emb_size)
    score_w = jnp.stack(params["score_w"], 0)                           # [C, E, E]
    score_b = jnp.stack(params["score_b"], 0).reshape(client_count, 1, emb_size)

    kern = functools.partial(_fe_fused_kernel, client_count=client_count)
    out = pl.pallas_call(
        kern,
        out_shape=jax.ShapeDtypeStruct((2, batch, client_count), jnp.float32),
        grid=(2,),  # side 0 = pos, side 1 = neg
        in_specs=[
            pl.BlockSpec((batch, emb_size), lambda s: (0, 0)),                     # u_g
            pl.BlockSpec((1, client_count, batch, emb_size),
                         lambda s: (s, 0, 0, 0)),                                  # items_g
            pl.BlockSpec((emb_size, emb_size), lambda s: (0, 0)),                  # dnn_user_w
            pl.BlockSpec((1, emb_size), lambda s: (0, 0)),                         # dnn_user_b
            pl.BlockSpec((client_count, emb_size, emb_size),
                         lambda s: (0, 0, 0)),                                     # dnn_w
            pl.BlockSpec((1, emb_size), lambda s: (0, 0)),                         # dnn_b
            pl.BlockSpec((client_count - 1, emb_size, emb_size),
                         lambda s: (0, 0, 0)),                                     # dec_w
            pl.BlockSpec((client_count - 1, 1, emb_size),
                         lambda s: (0, 0, 0)),                                     # dec_b
            pl.BlockSpec((client_count, emb_size, emb_size),
                         lambda s: (0, 0, 0)),                                     # score_w
            pl.BlockSpec((client_count, 1, emb_size),
                         lambda s: (0, 0, 0)),                                     # score_b
        ],
        out_specs=pl.BlockSpec((1, batch, client_count), lambda s: (s, 0, 0)),
        compiler_params=pltpu.CompilerParams(
            dimension_semantics=("parallel",)),  # v7x: one side per TensorCore
    )(u_g, items_g, dnn_user_w, dnn_user_b, dnn_w, dnn_b,
      dec_w, dec_b, score_w, score_b)

    pos_cum = out[0]                                  # [B, C] cumulative over clients
    neg_cum = out[1]
    pos_score = pos_cum[:, -1]
    neg_score = neg_cum[:, -1]
    pos_score_list = [pos_cum[:, i] for i in range(client_count)]
    neg_score_list = [neg_cum[:, i] for i in range(client_count)]
    return pos_score, neg_score, pos_score_list, neg_score_list


# ----------------------------------------------------------------------------
# Main
# ----------------------------------------------------------------------------
if __name__ == "__main__":
    USER_COUNT = 16
    ITEM_COUNT = 64
    EMB_SIZE = 32
    NUM_CLIENT_EMBS = 2                 # -> client_count = 3
    CLIENT_COUNT = NUM_CLIENT_EMBS + 1
    BATCH = 8

    key = jax.random.PRNGKey(0)
    pkey, ukey, pkey2, nkey = jax.random.split(key, 4)

    params = init_params(pkey, USER_COUNT, ITEM_COUNT, EMB_SIZE, CLIENT_COUNT)

    users = jax.random.randint(ukey, (BATCH,), 0, USER_COUNT)
    pos_items = jax.random.randint(pkey2, (BATCH,), 0, ITEM_COUNT)
    neg_items = jax.random.randint(nkey, (BATCH,), 0, ITEM_COUNT)

    pos_score, neg_score, pos_list, neg_list = fe_forward(
        params, users, pos_items, neg_items, client_count=CLIENT_COUNT)

    jax.block_until_ready((pos_score, neg_score, pos_list, neg_list))
    assert pos_score.shape == (BATCH,) and neg_score.shape == (BATCH,)
    assert len(pos_list) == CLIENT_COUNT and len(neg_list) == CLIENT_COUNT
    assert all(p.shape == (BATCH,) for p in pos_list + neg_list)
    print("KERNEL_OK")
</pallas_src>

<mosaic_0001>
module attributes {stable_mosaic.version = 11 : i64} {
  func.func @_fe_fused_kernel(%arg0: i32, %arg1: memref<8x32xf32, #tpu.memory_space<vmem>>, %arg2: memref<1x3x8x32xf32, #tpu.memory_space<vmem>>, %arg3: memref<32x32xf32, #tpu.memory_space<vmem>>, %arg4: memref<1x32xf32, #tpu.memory_space<vmem>>, %arg5: memref<3x32x32xf32, #tpu.memory_space<vmem>>, %arg6: memref<1x32xf32, #tpu.memory_space<vmem>>, %arg7: memref<2x32x32xf32, #tpu.memory_space<vmem>>, %arg8: memref<2x1x32xf32, #tpu.memory_space<vmem>>, %arg9: memref<3x32x32xf32, #tpu.memory_space<vmem>>, %arg10: memref<3x1x32xf32, #tpu.memory_space<vmem>>, %arg11: memref<1x8x3xf32, #tpu.memory_space<vmem>>) attributes {dimension_semantics = [#tpu.dimension_semantics<parallel>], iteration_bounds = array<i64: 2>, scalar_prefetch = 0 : i64, scratch_operands = 0 : i64, tpu.core_type = #tpu.core_type<tc>, window_params = [{pipeline_mode = #tpu.pipeline_mode<synchronous>, transform_indices = @transform_0, window_bounds = array<i64: 8, 32>}, {transform_indices = @transform_1, window_bounds = array<i64: 1, 3, 8, 32>}, {pipeline_mode = #tpu.pipeline_mode<synchronous>, transform_indices = @transform_2, window_bounds = array<i64: 32, 32>}, {pipeline_mode = #tpu.pipeline_mode<synchronous>, transform_indices = @transform_3, window_bounds = array<i64: 1, 32>}, {pipeline_mode = #tpu.pipeline_mode<synchronous>, transform_indices = @transform_4, window_bounds = array<i64: 3, 32, 32>}, {pipeline_mode = #tpu.pipeline_mode<synchronous>, transform_indices = @transform_5, window_bounds = array<i64: 1, 32>}, {pipeline_mode = #tpu.pipeline_mode<synchronous>, transform_indices = @transform_6, window_bounds = array<i64: 2, 32, 32>}, {pipeline_mode = #tpu.pipeline_mode<synchronous>, transform_indices = @transform_7, window_bounds = array<i64: 2, 1, 32>}, {pipeline_mode = #tpu.pipeline_mode<synchronous>, transform_indices = @transform_8, window_bounds = array<i64: 3, 32, 32>}, {pipeline_mode = #tpu.pipeline_mode<synchronous>, transform_indices = @transform_9, window_bounds = array<i64: 3, 1, 32>}, {transform_indices = @transform_10, window_bounds = array<i64: 1, 8, 3>}]} {
    %c0 = arith.constant 0 : index
    %c0_0 = arith.constant 0 : index
    %0 = vector.load %arg1[%c0, %c0_0] : memref<8x32xf32, #tpu.memory_space<vmem>>, vector<8x32xf32>
    %1 = arith.truncf %0 : vector<8x32xf32> to vector<8x32xbf16>
    %c0_1 = arith.constant 0 : index
    %c0_2 = arith.constant 0 : index
    %2 = vector.load %arg3[%c0_1, %c0_2] : memref<32x32xf32, #tpu.memory_space<vmem>>, vector<32x32xf32>
    %3 = arith.truncf %2 : vector<32x32xf32> to vector<32x32xbf16>
    %cst = arith.constant dense<0.000000e+00> : vector<8x32xf32>
    %4 = tpu.matmul %1, %3, %cst {dimension_numbers = #tpu.dot_dimension_numbers<[1], [0], [0], [1], [0, 0, 1, 1], [], []>} : vector<8x32xbf16>, vector<32x32xbf16>, vector<8x32xf32> -> vector<8x32xf32>
    %c0_3 = arith.constant 0 : index
    %c0_4 = arith.constant 0 : index
    %5 = vector.load %arg4[%c0_3, %c0_4] : memref<1x32xf32, #tpu.memory_space<vmem>>, vector<1x32xf32>
    %6 = vector.broadcast %5 : vector<1x32xf32> to vector<8x32xf32>
    %7 = arith.addf %4, %6 : vector<8x32xf32>
    %c0_5 = arith.constant 0 : index
    %c0_6 = arith.constant 0 : index
    %c0_7 = arith.constant 0 : index
    %c0_8 = arith.constant 0 : index
    %8 = vector.load %arg2[%c0_5, %c0_6, %c0_7, %c0_8] : memref<1x3x8x32xf32, #tpu.memory_space<vmem>>, vector<1x3x8x32xf32>
    %9 = vector.shape_cast %8 : vector<1x3x8x32xf32> to vector<3x8x32xf32>
    %10 = vector.extract_strided_slice %9 {offsets = [0, 0, 0], sizes = [1, 8, 32], strides = [1, 1, 1]} : vector<3x8x32xf32> to vector<1x8x32xf32>
    %11 = vector.shape_cast %10 : vector<1x8x32xf32> to vector<8x32xf32>
    %12 = arith.truncf %11 : vector<8x32xf32> to vector<8x32xbf16>
    %c0_9 = arith.constant 0 : index
    %c0_10 = arith.constant 0 : index
    %c0_11 = arith.constant 0 : index
    %13 = vector.load %arg5[%c0_9, %c0_10, %c0_11] : memref<3x32x32xf32, #tpu.memory_space<vmem>>, vector<1x32x32xf32>
    %14 = vector.shape_cast %13 : vector<1x32x32xf32> to vector<32x32xf32>
    %15 = arith.truncf %14 : vector<32x32xf32> to vector<32x32xbf16>
    %cst_12 = arith.constant dense<0.000000e+00> : vector<8x32xf32>
    %16 = tpu.matmul %12, %15, %cst_12 {dimension_numbers = #tpu.dot_dimension_numbers<[1], [0], [0], [1], [0, 0, 1, 1], [], []>} : vector<8x32xbf16>, vector<32x32xbf16>, vector<8x32xf32> -> vector<8x32xf32>
    %17 = vector.extract_strided_slice %9 {offsets = [1, 0, 0], sizes = [1, 8, 32], strides = [1, 1, 1]} : vector<3x8x32xf32> to vector<1x8x32xf32>
    %18 = vector.shape_cast %17 : vector<1x8x32xf32> to vector<8x32xf32>
    %19 = arith.truncf %18 : vector<8x32xf32> to vector<8x32xbf16>
    %c1 = arith.constant 1 : index
    %c0_13 = arith.constant 0 : index
    %c0_14 = arith.constant 0 : index
    %20 = vector.load %arg5[%c1, %c0_13, %c0_14] : memref<3x32x32xf32, #tpu.memory_space<vmem>>, vector<1x32x32xf32>
    %21 = vector.shape_cast %20 : vector<1x32x32xf32> to vector<32x32xf32>
    %22 = arith.truncf %21 : vector<32x32xf32> to vector<32x32xbf16>
    %cst_15 = arith.constant dense<0.000000e+00> : vector<8x32xf32>
    %23 = tpu.matmul %19, %22, %cst_15 {dimension_numbers = #tpu.dot_dimension_numbers<[1], [0], [0], [1], [0, 0, 1, 1], [], []>} : vector<8x32xbf16>, vector<32x32xbf16>, vector<8x32xf32> -> vector<8x32xf32>
    %24 = arith.addf %16, %23 : vector<8x32xf32>
    %25 = vector.extract_strided_slice %9 {offsets = [2, 0, 0], sizes = [1, 8, 32], strides = [1, 1, 1]} : vector<3x8x32xf32> to vector<1x8x32xf32>
    %26 = vector.shape_cast %25 : vector<1x8x32xf32> to vector<8x32xf32>
    %27 = arith.truncf %26 : vector<8x32xf32> to vector<8x32xbf16>
    %c2 = arith.constant 2 : index
    %c0_16 = arith.constant 0 : index
    %c0_17 = arith.constant 0 : index
    %28 = vector.load %arg5[%c2, %c0_16, %c0_17] : memref<3x32x32xf32, #tpu.memory_space<vmem>>, vector<1x32x32xf32>
    %29 = vector.shape_cast %28 : vector<1x32x32xf32> to vector<32x32xf32>
    %30 = arith.truncf %29 : vector<32x32xf32> to vector<32x32xbf16>
    %cst_18 = arith.constant dense<0.000000e+00> : vector<8x32xf32>
    %31 = tpu.matmul %27, %30, %cst_18 {dimension_numbers = #tpu.dot_dimension_numbers<[1], [0], [0], [1], [0, 0, 1, 1], [], []>} : vector<8x32xbf16>, vector<32x32xbf16>, vector<8x32xf32> -> vector<8x32xf32>
    %32 = arith.addf %24, %31 : vector<8x32xf32>
    %c0_19 = arith.constant 0 : index
    %c0_20 = arith.constant 0 : index
    %33 = vector.load %arg6[%c0_19, %c0_20] : memref<1x32xf32, #tpu.memory_space<vmem>>, vector<1x32xf32>
    %34 = vector.broadcast %33 : vector<1x32xf32> to vector<8x32xf32>
    %35 = arith.addf %32, %34 : vector<8x32xf32>
    %36 = vector.extract_strided_slice %9 {offsets = [1, 0, 0], sizes = [1, 8, 32], strides = [1, 1, 1]} : vector<3x8x32xf32> to vector<1x8x32xf32>
    %37 = vector.shape_cast %36 : vector<1x8x32xf32> to vector<8x32xf32>
    %38 = arith.truncf %37 : vector<8x32xf32> to vector<8x32xbf16>
    %c0_21 = arith.constant 0 : index
    %c0_22 = arith.constant 0 : index
    %c0_23 = arith.constant 0 : index
    %39 = vector.load %arg7[%c0_21, %c0_22, %c0_23] : memref<2x32x32xf32, #tpu.memory_space<vmem>>, vector<1x32x32xf32>
    %40 = vector.shape_cast %39 : vector<1x32x32xf32> to vector<32x32xf32>
    %41 = arith.truncf %40 : vector<32x32xf32> to vector<32x32xbf16>
    %cst_24 = arith.constant dense<0.000000e+00> : vector<8x32xf32>
    %42 = tpu.matmul %38, %41, %cst_24 {dimension_numbers = #tpu.dot_dimension_numbers<[1], [0], [0], [1], [0, 0, 1, 1], [], []>} : vector<8x32xbf16>, vector<32x32xbf16>, vector<8x32xf32> -> vector<8x32xf32>
    %c0_25 = arith.constant 0 : index
    %c0_26 = arith.constant 0 : index
    %c0_27 = arith.constant 0 : index
    %43 = vector.load %arg8[%c0_25, %c0_26, %c0_27] : memref<2x1x32xf32, #tpu.memory_space<vmem>>, vector<1x1x32xf32>
    %44 = vector.shape_cast %43 : vector<1x1x32xf32> to vector<1x32xf32>
    %45 = vector.broadcast %44 : vector<1x32xf32> to vector<8x32xf32>
    %46 = arith.addf %42, %45 : vector<8x32xf32>
    %47 = vector.extract_strided_slice %9 {offsets = [2, 0, 0], sizes = [1, 8, 32], strides = [1, 1, 1]} : vector<3x8x32xf32> to vector<1x8x32xf32>
    %48 = vector.shape_cast %47 : vector<1x8x32xf32> to vector<8x32xf32>
    %49 = arith.truncf %48 : vector<8x32xf32> to vector<8x32xbf16>
    %c1_28 = arith.constant 1 : index
    %c0_29 = arith.constant 0 : index
    %c0_30 = arith.constant 0 : index
    %50 = vector.load %arg7[%c1_28, %c0_29, %c0_30] : memref<2x32x32xf32, #tpu.memory_space<vmem>>, vector<1x32x32xf32>
    %51 = vector.shape_cast %50 : vector<1x32x32xf32> to vector<32x32xf32>
    %52 = arith.truncf %51 : vector<32x32xf32> to vector<32x32xbf16>
    %cst_31 = arith.constant dense<0.000000e+00> : vector<8x32xf32>
    %53 = tpu.matmul %49, %52, %cst_31 {dimension_numbers = #tpu.dot_dimension_numbers<[1], [0], [0], [1], [0, 0, 1, 1], [], []>} : vector<8x32xbf16>, vector<32x32xbf16>, vector<8x32xf32> -> vector<8x32xf32>
    %c1_32 = arith.constant 1 : index
    %c0_33 = arith.constant 0 : index
    %c0_34 = arith.constant 0 : index
    %54 = vector.load %arg8[%c1_32, %c0_33, %c0_34] : memref<2x1x32xf32, #tpu.memory_space<vmem>>, vector<1x1x32xf32>
    %55 = vector.shape_cast %54 : vector<1x1x32xf32> to vector<1x32xf32>
    %56 = vector.broadcast %55 : vector<1x32xf32> to vector<8x32xf32>
    %57 = arith.addf %53, %56 : vector<8x32xf32>
    %cst_35 = arith.constant 0.000000e+00 : f32
    %58 = vector.broadcast %cst_35 : f32 to vector<8x1xf32>
    %59 = arith.truncf %35 : vector<8x32xf32> to vector<8x32xbf16>
    %c0_36 = arith.constant 0 : index
    %c0_37 = arith.constant 0 : index
    %c0_38 = arith.constant 0 : index
    %60 = vector.load %arg9[%c0_36, %c0_37, %c0_38] : memref<3x32x32xf32, #tpu.memory_space<vmem>>, vector<1x32x32xf32>
    %61 = vector.shape_cast %60 : vector<1x32x32xf32> to vector<32x32xf32>
    %62 = arith.truncf %61 : vector<32x32xf32> to vector<32x32xbf16>
    %cst_39 = arith.constant dense<0.000000e+00> : vector<8x32xf32>
    %63 = tpu.matmul %59, %62, %cst_39 {dimension_numbers = #tpu.dot_dimension_numbers<[1], [0], [0], [1], [0, 0, 1, 1], [], []>} : vector<8x32xbf16>, vector<32x32xbf16>, vector<8x32xf32> -> vector<8x32xf32>
    %c0_40 = arith.constant 0 : index
    %c0_41 = arith.constant 0 : index
    %c0_42 = arith.constant 0 : index
    %64 = vector.load %arg10[%c0_40, %c0_41, %c0_42] : memref<3x1x32xf32, #tpu.memory_space<vmem>>, vector<1x1x32xf32>
    %65 = vector.shape_cast %64 : vector<1x1x32xf32> to vector<1x32xf32>
    %66 = vector.broadcast %65 : vector<1x32xf32> to vector<8x32xf32>
    %67 = arith.addf %63, %66 : vector<8x32xf32>
    %68 = arith.negf %67 : vector<8x32xf32>
    %69 = math.exp %68 : vector<8x32xf32>
    %cst_43 = arith.constant 1.000000e+00 : f32
    %70 = vector.broadcast %cst_43 : f32 to vector<8x32xf32>
    %71 = arith.addf %70, %69 : vector<8x32xf32>
    %72 = arith.divf %70, %71 : vector<8x32xf32>
    %73 = arith.mulf %72, %7 : vector<8x32xf32>
    %cst_44 = arith.constant dense<0.000000e+00> : vector<8xf32>
    %74 = vector.multi_reduction <add>, %73, %cst_44 [1] : vector<8x32xf32> to vector<8xf32>
    %75 = vector.shape_cast %74 : vector<8xf32> to vector<8x1xf32>
    %76 = arith.addf %58, %75 : vector<8x1xf32>
    %77 = arith.truncf %46 : vector<8x32xf32> to vector<8x32xbf16>
    %c1_45 = arith.constant 1 : index
    %c0_46 = arith.constant 0 : index
    %c0_47 = arith.constant 0 : index
    %78 = vector.load %arg9[%c1_45, %c0_46, %c0_47] : memref<3x32x32xf32, #tpu.memory_space<vmem>>, vector<1x32x32xf32>
    %79 = vector.shape_cast %78 : vector<1x32x32xf32> to vector<32x32xf32>
    %80 = arith.truncf %79 : vector<32x32xf32> to vector<32x32xbf16>
    %cst_48 = arith.constant dense<0.000000e+00> : vector<8x32xf32>
    %81 = tpu.matmul %77, %80, %cst_48 {dimension_numbers = #tpu.dot_dimension_numbers<[1], [0], [0], [1], [0, 0, 1, 1], [], []>} : vector<8x32xbf16>, vector<32x32xbf16>, vector<8x32xf32> -> vector<8x32xf32>
    %c1_49 = arith.constant 1 : index
    %c0_50 = arith.constant 0 : index
    %c0_51 = arith.constant 0 : index
    %82 = vector.load %arg10[%c1_49, %c0_50, %c0_51] : memref<3x1x32xf32, #tpu.memory_space<vmem>>, vector<1x1x32xf32>
    %83 = vector.shape_cast %82 : vector<1x1x32xf32> to vector<1x32xf32>
    %84 = vector.broadcast %83 : vector<1x32xf32> to vector<8x32xf32>
    %85 = arith.addf %81, %84 : vector<8x32xf32>
    %86 = arith.negf %85 : vector<8x32xf32>
    %87 = math.exp %86 : vector<8x32xf32>
    %cst_52 = arith.constant 1.000000e+00 : f32
    %88 = vector.broadcast %cst_52 : f32 to vector<8x32xf32>
    %89 = arith.addf %88, %87 : vector<8x32xf32>
    %90 = arith.divf %88, %89 : vector<8x32xf32>
    %91 = arith.mulf %90, %7 : vector<8x32xf32>
    %cst_53 = arith.constant dense<0.000000e+00> : vector<8xf32>
    %92 = vector.multi_reduction <add>, %91, %cst_53 [1] : vector<8x32xf32> to vector<8xf32>
    %93 = vector.shape_cast %92 : vector<8xf32> to vector<8x1xf32>
    %94 = arith.addf %76, %93 : vector<8x1xf32>
    %95 = arith.truncf %57 : vector<8x32xf32> to vector<8x32xbf16>
    %c2_54 = arith.constant 2 : index
    %c0_55 = arith.constant 0 : index
    %c0_56 = arith.constant 0 : index
    %96 = vector.load %arg9[%c2_54, %c0_55, %c0_56] : memref<3x32x32xf32, #tpu.memory_space<vmem>>, vector<1x32x32xf32>
    %97 = vector.shape_cast %96 : vector<1x32x32xf32> to vector<32x32xf32>
    %98 = arith.truncf %97 : vector<32x32xf32> to vector<32x32xbf16>
    %cst_57 = arith.constant dense<0.000000e+00> : vector<8x32xf32>
    %99 = tpu.matmul %95, %98, %cst_57 {dimension_numbers = #tpu.dot_dimension_numbers<[1], [0], [0], [1], [0, 0, 1, 1], [], []>} : vector<8x32xbf16>, vector<32x32xbf16>, vector<8x32xf32> -> vector<8x32xf32>
    %c2_58 = arith.constant 2 : index
    %c0_59 = arith.constant 0 : index
    %c0_60 = arith.constant 0 : index
    %100 = vector.load %arg10[%c2_58, %c0_59, %c0_60] : memref<3x1x32xf32, #tpu.memory_space<vmem>>, vector<1x1x32xf32>
    %101 = vector.shape_cast %100 : vector<1x1x32xf32> to vector<1x32xf32>
    %102 = vector.broadcast %101 : vector<1x32xf32> to vector<8x32xf32>
    %103 = arith.addf %99, %102 : vector<8x32xf32>
    %104 = arith.negf %103 : vector<8x32xf32>
    %105 = math.exp %104 : vector<8x32xf32>
    %cst_61 = arith.constant 1.000000e+00 : f32
    %106 = vector.broadcast %cst_61 : f32 to vector<8x32xf32>
    %107 = arith.addf %106, %105 : vector<8x32xf32>
    %108 = arith.divf %106, %107 : vector<8x32xf32>
    %109 = arith.mulf %108, %7 : vector<8x32xf32>
    %cst_62 = arith.constant dense<0.000000e+00> : vector<8xf32>
    %110 = vector.multi_reduction <add>, %109, %cst_62 [1] : vector<8x32xf32> to vector<8xf32>
    %111 = vector.shape_cast %110 : vector<8xf32> to vector<8x1xf32>
    %112 = arith.addf %94, %111 : vector<8x1xf32>
    %113 = tpu.concatenate %76, %94, %112 in 1 : vector<8x1xf32>, vector<8x1xf32>, vector<8x1xf32> -> vector<8x3xf32>
    %c0_63 = arith.constant 0 : index
    %c0_64 = arith.constant 0 : index
    %c0_65 = arith.constant 0 : index
    %114 = vector.load %arg11[%c0_63, %c0_64, %c0_65] : memref<1x8x3xf32, #tpu.memory_space<vmem>>, vector<1x8x3xf32>
    %115 = vector.shape_cast %114 : vector<1x8x3xf32> to vector<8x3xf32>
    %116 = vector.shape_cast %113 : vector<8x3xf32> to vector<1x8x3xf32>
    tpu.vector_store %arg11[%c0_63, %c0_64, %c0_65], %116 {strides = array<i32>} : memref<1x8x3xf32, #tpu.memory_space<vmem>>, vector<1x8x3xf32>,
    return
  }
  func.func @transform_0(%arg0: i32) -> (i32, i32) {
    %c0_i32 = arith.constant 0 : i32
    %c0_i32_0 = arith.constant 0 : i32
    %c0_i32_1 = arith.constant 0 : i32
    return %c0_i32, %c0_i32_0 : i32, i32
  }
  func.func @transform_1(%arg0: i32) -> (i32, i32, i32, i32) {
    %c0_i32 = arith.constant 0 : i32
    %c0_i32_0 = arith.constant 0 : i32
    %c0_i32_1 = arith.constant 0 : i32
    %c0_i32_2 = arith.constant 0 : i32
    return %arg0, %c0_i32, %c0_i32_0, %c0_i32_1 : i32, i32, i32, i32
  }
  func.func @transform_2(%arg0: i32) -> (i32, i32) {
    %c0_i32 = arith.constant 0 : i32
    %c0_i32_0 = arith.constant 0 : i32
    %c0_i32_1 = arith.constant 0 : i32
    return %c0_i32, %c0_i32_0 : i32, i32
  }
  func.func @transform_3(%arg0: i32) -> (i32, i32) {
    %c0_i32 = arith.constant 0 : i32
    %c0_i32_0 = arith.constant 0 : i32
    %c0_i32_1 = arith.constant 0 : i32
    return %c0_i32, %c0_i32_0 : i32, i32
  }
  func.func @transform_4(%arg0: i32) -> (i32, i32, i32) {
    %c0_i32 = arith.constant 0 : i32
    %c0_i32_0 = arith.constant 0 : i32
    %c0_i32_1 = arith.constant 0 : i32
    %c0_i32_2 = arith.constant 0 : i32
    return %c0_i32, %c0_i32_0, %c0_i32_1 : i32, i32, i32
  }
  func.func @transform_5(%arg0: i32) -> (i32, i32) {
    %c0_i32 = arith.constant 0 : i32
    %c0_i32_0 = arith.constant 0 : i32
    %c0_i32_1 = arith.constant 0 : i32
    return %c0_i32, %c0_i32_0 : i32, i32
  }
  func.func @transform_6(%arg0: i32) -> (i32, i32, i32) {
    %c0_i32 = arith.constant 0 : i32
    %c0_i32_0 = arith.constant 0 : i32
    %c0_i32_1 = arith.constant 0 : i32
    %c0_i32_2 = arith.constant 0 : i32
    return %c0_i32, %c0_i32_0, %c0_i32_1 : i32, i32, i32
  }
  func.func @transform_7(%arg0: i32) -> (i32, i32, i32) {
    %c0_i32 = arith.constant 0 : i32
    %c0_i32_0 = arith.constant 0 : i32
    %c0_i32_1 = arith.constant 0 : i32
    %c0_i32_2 = arith.constant 0 : i32
    return %c0_i32, %c0_i32_0, %c0_i32_1 : i32, i32, i32
  }
  func.func @transform_8(%arg0: i32) -> (i32, i32, i32) {
    %c0_i32 = arith.constant 0 : i32
    %c0_i32_0 = arith.constant 0 : i32
    %c0_i32_1 = arith.constant 0 : i32
    %c0_i32_2 = arith.constant 0 : i32
    return %c0_i32, %c0_i32_0, %c0_i32_1 : i32, i32, i32
  }
  func.func @transform_9(%arg0: i32) -> (i32, i32, i32) {
    %c0_i32 = arith.constant 0 : i32
    %c0_i32_0 = arith.constant 0 : i32
    %c0_i32_1 = arith.constant 0 : i32
    %c0_i32_2 = arith.constant 0 : i32
    return %c0_i32, %c0_i32_0, %c0_i32_1 : i32, i32, i32
  }
  func.func @transform_10(%arg0: i32) -> (i32, i32, i32) {
    %c0_i32 = arith.constant 0 : i32
    %c0_i32_0 = arith.constant 0 : i32
    %c0_i32_1 = arith.constant 0 : i32
    return %arg0, %c0_i32, %c0_i32_0 : i32, i32, i32
  }
}

</mosaic_0001>

<llo_original>
// kernel: fe_forward.1
$region0: #{fe_forward.1}
  #allocation0 [shape = 'u32[]', space=smem, size = 0x4, offset = 0x4, fixed_abs, tag = 'smem constant byte address 0x4 - core index']
  #allocation1 [shape = 'u32[144,128]{1,0:T(1,128)}', space=vmem, size = 0x12000, scoped, tag = 'internal scratch']
  %s0 = inlined_call_operand.vmem [shape: f32[8,32], index: 0, kind: input, shape index: {}]
  %s1 = inlined_call_operand.vmem [shape: f32[2,3,8,32], index: 1, kind: input, shape index: {}]
  %s2 = inlined_call_operand.vmem [shape: f32[32,32], index: 2, kind: input, shape index: {}]
  %s3 = inlined_call_operand.vmem [shape: f32[1,32], index: 3, kind: input, shape index: {}]
  %s4 = inlined_call_operand.vmem [shape: f32[3,32,32], index: 4, kind: input, shape index: {}]
  %s5 = inlined_call_operand.vmem [shape: f32[1,32], index: 5, kind: input, shape index: {}]
  %s6 = inlined_call_operand.vmem [shape: f32[2,32,32], index: 6, kind: input, shape index: {}]
  %s7 = inlined_call_operand.vmem [shape: f32[2,1,32], index: 7, kind: input, shape index: {}]
  %s8 = inlined_call_operand.vmem [shape: f32[3,32,32], index: 8, kind: input, shape index: {}]
  %s9 = inlined_call_operand.vmem [shape: f32[3,1,32], index: 9, kind: input, shape index: {}]
  %s10 = inlined_call_operand.vmem [shape: f32[2,8,3], index: 10, kind: output, shape index: {}]
  %s11 = sld [smem:[#allocation0]]
  $region73: #{fe_forward.1} parent=0
    _
  %s13 = ssub.s32 1, %s11
  %s14 = scalar_select 0, %s13, %s11
  loop: start=0, step=1, limit=4
  $region2: #{fe_forward.1} parent=0 // loop_pre_header
    _
  $region3: #{fe_forward.1} parent=0 // loop_header
    %s16 = sphi 0, %s20
    %p17 = scmp.ge.s32.totalorder %s16, 4
    %s24 = sphi 0, %s24
    %s26 = sphi 0, %s24
    %s27 = sphi 0, %s26
    %s41 = sphi 0, %s27
    %s47 = sphi 0, %s49
    %s50 = sphi 0, %s47
    %s51 = sphi 0, %s50
    %s67 = sphi 0, %s51
    %s71 = sphi 0, %s71
    %s73 = sphi 0, %s71
    %s74 = sphi 0, %s73
    %s88 = sphi 0, %s74
    %s92 = sphi 0, %s92
    %s94 = sphi 0, %s92
    %s95 = sphi 0, %s94
    %s109 = sphi 0, %s95
    %s113 = sphi 0, %s113
    %s115 = sphi 0, %s113
    %s116 = sphi 0, %s115
    %s130 = sphi 0, %s116
    %s134 = sphi 0, %s134
    %s136 = sphi 0, %s134
    %s137 = sphi 0, %s136
    %s151 = sphi 0, %s137
    %s155 = sphi 0, %s155
    %s157 = sphi 0, %s155
    %s158 = sphi 0, %s157
    %s172 = sphi 0, %s158
    %s176 = sphi 0, %s176
    %s178 = sphi 0, %s176
    %s179 = sphi 0, %s178
    %s193 = sphi 0, %s179
    %s197 = sphi 0, %s197
    %s199 = sphi 0, %s197
    %s200 = sphi 0, %s199
    %s214 = sphi 0, %s200
    %s218 = sphi 0, %s218
    %s220 = sphi 0, %s218
    %s221 = sphi 0, %s220
    %s235 = sphi 0, %s221
    %s241 = sphi 0, %s243
    %s244 = sphi 0, %s241
    %s245 = sphi 0, %s244
    %s261 = sphi 0, %s245
  $region4: #{fe_forward.1} parent=0 // loop_header_branch
    %19 = sbr.rel (%p17) target = $region8
  $region5: #{fe_forward.1} parent=0 // loop_body
    %s21 = ssub.s32 %s16, 1
    %s22 = ssub.s32 %s16, 2
    %s23 = sadd.s32 %s16, 1
    %s25 = sadd.s32 %s24, 1
    %p28 = scmp.eq.s32.totalorder %s16, 1
    %p29 = scmp.ne.s32.totalorder %s24, %s26
    %p30 = scmp.eq.s32.totalorder %s16, 0
    %p31 = por %p29, %p30
    %p32 = scmp.ne.s32.totalorder %s24, %s26
    %p33 = scmp.eq.s32.totalorder %s21, 1
    %p34 = por %p32, %p33
    %p35 = scmp.ne.s32.totalorder %s26, %s27
    %p36 = scmp.eq.s32.totalorder %s21, 0
    %p37 = por %p35, %p36
    %p38 = scmp.ne.s32.totalorder %s26, %s27
    %p39 = scmp.eq.s32.totalorder %s22, 1
    %p40 = por %p38, %p39
    %p42 = scmp.ne.s32.totalorder %s27, %s41
    %p43 = scmp.eq.s32.totalorder %s22, 0
    %p44 = por %p42, %p43
    %s45 = ssub.s32 %s16, %s23
    %p46 = scmp.eq.s32.totalorder %s45, 0
    %s48 = sadd.s32 %s47, 1
    %s49 = scalar_select %p46, %s47, %s48
    %p52 = pneg %p46
    %p53 = scmp.eq.s32.totalorder %s16, 1
    %p54 = por %p52, %p53
    %p55 = scmp.ne.s32.totalorder %s47, %s50
    %p56 = scmp.eq.s32.totalorder %s16, 0
    %p57 = por %p55, %p56
    %p58 = scmp.ne.s32.totalorder %s47, %s50
    %p59 = scmp.eq.s32.totalorder %s21, 1
    %p60 = por %p58, %p59
    %p61 = scmp.ne.s32.totalorder %s50, %s51
    %p62 = scmp.eq.s32.totalorder %s21, 0
    %p63 = por %p61, %p62
    %p64 = scmp.ne.s32.totalorder %s50, %s51
    %p65 = scmp.eq.s32.totalorder %s22, 1
    %p66 = por %p64, %p65
    %p68 = scmp.ne.s32.totalorder %s51, %s67
    %p69 = scmp.eq.s32.totalorder %s22, 0
    %p70 = por %p68, %p69
    %s72 = sadd.s32 %s71, 1
    %p75 = scmp.eq.s32.totalorder %s16, 1
    %p76 = scmp.ne.s32.totalorder %s71, %s73
    %p77 = scmp.eq.s32.totalorder %s16, 0
    %p78 = por %p76, %p77
    %p79 = scmp.ne.s32.totalorder %s71, %s73
    %p80 = scmp.eq.s32.totalorder %s21, 1
    %p81 = por %p79, %p80
    %p82 = scmp.ne.s32.totalorder %s73, %s74
    %p83 = scmp.eq.s32.totalorder %s21, 0
    %p84 = por %p82, %p83
    %p85 = scmp.ne.s32.totalorder %s73, %s74
    %p86 = scmp.eq.s32.totalorder %s22, 1
    %p87 = por %p85, %p86
    %p89 = scmp.ne.s32.totalorder %s74, %s88
    %p90 = scmp.eq.s32.totalorder %s22, 0
    %p91 = por %p89, %p90
    %s93 = sadd.s32 %s92, 1
    %p96 = scmp.eq.s32.totalorder %s16, 1
    %p97 = scmp.ne.s32.totalorder %s92, %s94
    %p98 = scmp.eq.s32.totalorder %s16, 0
    %p99 = por %p97, %p98
    %p100 = scmp.ne.s32.totalorder %s92, %s94
    %p101 = scmp.eq.s32.totalorder %s21, 1
    %p102 = por %p100, %p101
    %p103 = scmp.ne.s32.totalorder %s94, %s95
    %p104 = scmp.eq.s32.totalorder %s21, 0
    %p105 = por %p103, %p104
    %p106 = scmp.ne.s32.totalorder %s94, %s95
    %p107 = scmp.eq.s32.totalorder %s22, 1
    %p108 = por %p106, %p107
    %p110 = scmp.ne.s32.totalorder %s95, %s109
    %p111 = scmp.eq.s32.totalorder %s22, 0
    %p112 = por %p110, %p111
    %s114 = sadd.s32 %s113, 1
    %p117 = scmp.eq.s32.totalorder %s16, 1
    %p118 = scmp.ne.s32.totalorder %s113, %s115
    %p119 = scmp.eq.s32.totalorder %s16, 0
    %p120 = por %p118, %p119
    %p121 = scmp.ne.s32.totalorder %s113, %s115
    %p122 = scmp.eq.s32.totalorder %s21, 1
    %p123 = por %p121, %p122
    %p124 = scmp.ne.s32.totalorder %s115, %s116
    %p125 = scmp.eq.s32.totalorder %s21, 0
    %p126 = por %p124, %p125
    %p127 = scmp.ne.s32.totalorder %s115, %s116
    %p128 = scmp.eq.s32.totalorder %s22, 1
    %p129 = por %p127, %p128
    %p131 = scmp.ne.s32.totalorder %s116, %s130
    %p132 = scmp.eq.s32.totalorder %s22, 0
    %p133 = por %p131, %p132
    %s135 = sadd.s32 %s134, 1
    %p138 = scmp.eq.s32.totalorder %s16, 1
    %p139 = scmp.ne.s32.totalorder %s134, %s136
    %p140 = scmp.eq.s32.totalorder %s16, 0
    %p141 = por %p139, %p140
    %p142 = scmp.ne.s32.totalorder %s134, %s136
    %p143 = scmp.eq.s32.totalorder %s21, 1
    %p144 = por %p142, %p143
    %p145 = scmp.ne.s32.totalorder %s136, %s137
    %p146 = scmp.eq.s32.totalorder %s21, 0
    %p147 = por %p145, %p146
    %p148 = scmp.ne.s32.totalorder %s136, %s137
    %p149 = scmp.eq.s32.totalorder %s22, 1
    %p150 = por %p148, %p149
    %p152 = scmp.ne.s32.totalorder %s137, %s151
    %p153 = scmp.eq.s32.totalorder %s22, 0
    %p154 = por %p152, %p153
    %s156 = sadd.s32 %s155, 1
    %p159 = scmp.eq.s32.totalorder %s16, 1
    %p160 = scmp.ne.s32.totalorder %s155, %s157
    %p161 = scmp.eq.s32.totalorder %s16, 0
    %p162 = por %p160, %p161
    %p163 = scmp.ne.s32.totalorder %s155, %s157
    %p164 = scmp.eq.s32.totalorder %s21, 1
    %p165 = por %p163, %p164
    %p166 = scmp.ne.s32.totalorder %s157, %s158
    %p167 = scmp.eq.s32.totalorder %s21, 0
    %p168 = por %p166, %p167
    %p169 = scmp.ne.s32.totalorder %s157, %s158
    %p170 = scmp.eq.s32.totalorder %s22, 1
    %p171 = por %p169, %p170
    %p173 = scmp.ne.s32.totalorder %s158, %s172
    %p174 = scmp.eq.s32.totalorder %s22, 0
    %p175 = por %p173, %p174
    %s177 = sadd.s32 %s176, 1
    %p180 = scmp.eq.s32.totalorder %s16, 1
    %p181 = scmp.ne.s32.totalorder %s176, %s178
    %p182 = scmp.eq.s32.totalorder %s16, 0
    %p183 = por %p181, %p182
    %p184 = scmp.ne.s32.totalorder %s176, %s178
    %p185 = scmp.eq.s32.totalorder %s21, 1
    %p186 = por %p184, %p185
    %p187 = scmp.ne.s32.totalorder %s178, %s179
    %p188 = scmp.eq.s32.totalorder %s21, 0
    %p189 = por %p187, %p188
    %p190 = scmp.ne.s32.totalorder %s178, %s179
    %p191 = scmp.eq.s32.totalorder %s22, 1
    %p192 = por %p190, %p191
    %p194 = scmp.ne.s32.totalorder %s179, %s193
    %p195 = scmp.eq.s32.totalorder %s22, 0
    %p196 = por %p194, %p195
    %s198 = sadd.s32 %s197, 1
    %p201 = scmp.eq.s32.totalorder %s16, 1
    %p202 = scmp.ne.s32.totalorder %s197, %s199
    %p203 = scmp.eq.s32.totalorder %s16, 0
    %p204 = por %p202, %p203
    %p205 = scmp.ne.s32.totalorder %s197, %s199
    %p206 = scmp.eq.s32.totalorder %s21, 1
    %p207 = por %p205, %p206
    %p208 = scmp.ne.s32.totalorder %s199, %s200
    %p209 = scmp.eq.s32.totalorder %s21, 0
    %p210 = por %p208, %p209
    %p211 = scmp.ne.s32.totalorder %s199, %s200
    %p212 = scmp.eq.s32.totalorder %s22, 1
    %p213 = por %p211, %p212
    %p215 = scmp.ne.s32.totalorder %s200, %s214
    %p216 = scmp.eq.s32.totalorder %s22, 0
    %p217 = por %p215, %p216
    %s219 = sadd.s32 %s218, 1
    %p222 = scmp.eq.s32.totalorder %s16, 1
    %p223 = scmp.ne.s32.totalorder %s218, %s220
    %p224 = scmp.eq.s32.totalorder %s16, 0
    %p225 = por %p223, %p224
    %p226 = scmp.ne.s32.totalorder %s218, %s220
    %p227 = scmp.eq.s32.totalorder %s21, 1
    %p228 = por %p226, %p227
    %p229 = scmp.ne.s32.totalorder %s220, %s221
    %p230 = scmp.eq.s32.totalorder %s21, 0
    %p231 = por %p229, %p230
    %p232 = scmp.ne.s32.totalorder %s220, %s221
    %p233 = scmp.eq.s32.totalorder %s22, 1
    %p234 = por %p232, %p233
    %p236 = scmp.ne.s32.totalorder %s221, %s235
    %p237 = scmp.eq.s32.totalorder %s22, 0
    %p238 = por %p236, %p237
    %s239 = ssub.s32 %s16, %s23
    %p240 = scmp.eq.s32.totalorder %s239, 0
    %s242 = sadd.s32 %s241, 1
    %s243 = scalar_select %p240, %s241, %s242
    %p246 = pneg %p240
    %p247 = scmp.eq.s32.totalorder %s16, 1
    %p248 = por %p246, %p247
    %p249 = scmp.ne.s32.totalorder %s241, %s244
    %p250 = scmp.eq.s32.totalorder %s16, 0
    %p251 = por %p249, %p250
    %p252 = scmp.ne.s32.totalorder %s241, %s244
    %p253 = scmp.eq.s32.totalorder %s21, 1
    %p254 = por %p252, %p253
    %p255 = scmp.ne.s32.totalorder %s244, %s245
    %p256 = scmp.eq.s32.totalorder %s21, 0
    %p257 = por %p255, %p256
    %p258 = scmp.ne.s32.totalorder %s244, %s245
    %p259 = scmp.eq.s32.totalorder %s22, 1
    %p260 = por %p258, %p259
    %p262 = scmp.ne.s32.totalorder %s245, %s261
    %p263 = scmp.eq.s32.totalorder %s22, 0
    %p264 = por %p262, %p263
    %p265 = scmp.le.s32.totalorder 1, %s16
    %p266 = scmp.lt.s32.totalorder %s16, 3
    %p267 = pnand %p265, %p266
    %p268 = pneg %p267
    // Predicated region
    $region9: #{fe_forward.1} parent=5 // pred_check
      _
    $region10: #{fe_forward.1} parent=5 // pred_check_branch
      %270 = sbr.rel (%p267) target = $region12
    $region11: #{fe_forward.1} parent=5 // pred_region
      %s271 = ssub.s32 %s16, 1
      // Predicated region
      $region13: #{fe_forward.1} parent=11 // pred_check
        %p272 = pneg %p37
      $region14: #{fe_forward.1} parent=11 // pred_check_branch
        %274 = sbr.rel (%p272) target = $region16
      $region15: #{fe_forward.1} parent=11 // pred_region
        _
      $region16: #{fe_forward.1} parent=11 // pred_fallthru
        _
      // Predicated region
      $region17: #{fe_forward.1} parent=11 // pred_check
        %p275 = pneg %p84
      $region18: #{fe_forward.1} parent=11 // pred_check_branch
        %277 = sbr.rel (%p275) target = $region20
      $region19: #{fe_forward.1} parent=11 // pred_region
        _
      $region20: #{fe_forward.1} parent=11 // pred_fallthru
        _
      // Predicated region
      $region21: #{fe_forward.1} parent=11 // pred_check
        %p278 = pneg %p105
      $region22: #{fe_forward.1} parent=11 // pred_check_branch
        %280 = sbr.rel (%p278) target = $region24
      $region23: #{fe_forward.1} parent=11 // pred_region
        _
      $region24: #{fe_forward.1} parent=11 // pred_fallthru
        _
      // Predicated region
      $region25: #{fe_forward.1} parent=11 // pred_check
        %p281 = pneg %p126
      $region26: #{fe_forward.1} parent=11 // pred_check_branch
        %283 = sbr.rel (%p281) target = $region28
      $region27: #{fe_forward.1} parent=11 // pred_region
        _
      $region28: #{fe_forward.1} parent=11 // pred_fallthru
        _
      // Predicated region
      $region29: #{fe_forward.1} parent=11 // pred_check
        %p284 = pneg %p147
      $region30: #{fe_forward.1} parent=11 // pred_check_branch
        %286 = sbr.rel (%p284) target = $region32
      $region31: #{fe_forward.1} parent=11 // pred_region
        _
      $region32: #{fe_forward.1} parent=11 // pred_fallthru
        _
      // Predicated region
      $region33: #{fe_forward.1} parent=11 // pred_check
        %p287 = pneg %p168
      $region34: #{fe_forward.1} parent=11 // pred_check_branch
        %289 = sbr.rel (%p287) target = $region36
      $region35: #{fe_forward.1} parent=11 // pred_region
        _
      $region36: #{fe_forward.1} parent=11 // pred_fallthru
        _
      // Predicated region
      $region37: #{fe_forward.1} parent=11 // pred_check
        %p290 = pneg %p189
      $region38: #{fe_forward.1} parent=11 // pred_check_branch
        %292 = sbr.rel (%p290) target = $region40
      $region39: #{fe_forward.1} parent=11 // pred_region
        _
      $region40: #{fe_forward.1} parent=11 // pred_fallthru
        _
      // Predicated region
      $region41: #{fe_forward.1} parent=11 // pred_check
        %p293 = pneg %p210
      $region42: #{fe_forward.1} parent=11 // pred_check_branch
        %295 = sbr.rel (%p293) target = $region44
      $region43: #{fe_forward.1} parent=11 // pred_region
        _
      $region44: #{fe_forward.1} parent=11 // pred_fallthru
        _
      // Predicated region
      $region45: #{fe_forward.1} parent=11 // pred_check
        %p296 = pneg %p231
      $region46: #{fe_forward.1} parent=11 // pred_check_branch
        %298 = sbr.rel (%p296) target = $region48
      $region47: #{fe_forward.1} parent=11 // pred_region
        _
      $region48: #{fe_forward.1} parent=11 // pred_fallthru
        _
    $region12: #{fe_forward.1} parent=5 // pred_fallthru
      _
    %p299 = scmp.lt.s32.totalorder %s16, 2
    // Predicated region
    $region49: #{fe_forward.1} parent=5 // pred_check
      %p300 = pneg %p299
    $region50: #{fe_forward.1} parent=5 // pred_check_branch
      %302 = sbr.rel (%p300) target = $region52
    $region51: #{fe_forward.1} parent=5 // pred_region
      // Predicated region
      $region53: #{fe_forward.1} parent=51 // pred_check
        %p303 = pneg %p57
      $region54: #{fe_forward.1} parent=51 // pred_check_branch
        %305 = sbr.rel (%p303) target = $region56
      $region55: #{fe_forward.1} parent=51 // pred_region
        %p306 = scmp.lt.s32.totalorder %s16, 1
        %s307 = scalar_select %p306, %s16, 1
        %s308 = smul.addr %s307, 3
        %s309 = smul.addr %s308, 8
        %s310 = scalar_lea.vmem %s1, %s309
      $region56: #{fe_forward.1} parent=51 // pred_fallthru
        _
    $region52: #{fe_forward.1} parent=5 // pred_fallthru
      _
    %p311 = scmp.le.s32.totalorder 1, %s16
    %p312 = scmp.lt.s32.totalorder %s16, 3
    %p313 = pnand %p311, %p312
    %p314 = pneg %p313
    // Predicated region
    $region57: #{fe_forward.1} parent=5 // pred_check
      _
    $region58: #{fe_forward.1} parent=5 // pred_check_branch
      %316 = sbr.rel (%p313) target = $region60
    $region59: #{fe_forward.1} parent=5 // pred_region
      %s317 = ssub.s32 %s16, 1
      %p318 = pneg %p37
      %p319 = pneg %p34
      %p320 = scmp.lt.s32.totalorder %s21, 1
      %s321 = scalar_select %p320, %s21, 1
      %s322 = smul.addr %s321, 3
      %s323 = smul.addr %s322, 8
      %s324 = scalar_lea.vmem %s1, %s323
      %p325 = pneg %p63
      %p326 = pneg %p60
      %p327 = pneg %p84
      %p328 = pneg %p81
      %p329 = pneg %p105
      %p330 = pneg %p102
      %p331 = pneg %p126
      %p332 = pneg %p123
      %p333 = pneg %p147
      %p334 = pneg %p144
      %p335 = pneg %p168
      %p336 = pneg %p165
      %p337 = pneg %p189
      %p338 = pneg %p186
      %p339 = pneg %p210
      %p340 = pneg %p207
      %p341 = pneg %p231
      %p342 = pneg %p228
      %p343 = pneg %p257
      %p344 = pneg %p254
      %p345 = scmp.lt.s32.totalorder %s21, 1
      %s346 = scalar_select %p345, %s21, 1
      %s347 = smul.addr %s346, 8
      %s348 = scalar_lea.vmem %s10, %s347
      %p349 = scmp.lt.s32.totalorder %s21, 1
      %s350 = scalar_select %p349, %s21, 1
      %s351 = smul.addr %s350, 3
      %s352 = smul.addr %s351, 8
      %s353 = scalar_lea.vmem %s1, %s352
      %p354 = scmp.lt.s32.totalorder %s21, 1
      %s355 = scalar_select %p354, %s21, 1
      %s356 = smul.addr %s355, 8
      %s357 = scalar_lea.vmem %s10, %s356
      %v359 = vld [vmem:[%s0] sm:$0xff]
      %v360 = vpack.c.bf16 %v359, %v359
      %v361 = vld [vmem:[%s2] sm:$0xff]
      %v362 = vld [vmem:[%s2 + $0x8] sm:$0xff]
      %v363 = vld [vmem:[%s2 + $0x10] sm:$0xff]
      %v364 = vld [vmem:[%s2 + $0x18] sm:$0xff]
      %v365 = vpack.c.bf16 %v362, %v361
      %v366 = vpack.c.bf16 %v364, %v363
      %v367 = vld [vmem:[%s3] sm:$0x1]
      %v369 = vlaneseq
      %v370 = vshrl.u32 %v369, 7
      %v371 = vsub.s32 0, %v370
      %v372 = vrot.slane %v367, %v371
      %vm374 = vcmask 261120
      %v376 = vsel %vm374, %v360, 0
      %378 = vmatprep.subr.bf16.mxu0 0
      %379 = vmatpush1.bf16.msra.mxu0 %v365
      %380 = vmatprep.subr.bf16.mxu0 0
      %381 = vmatpush1.bf16.msra.mxu0 %v366
      %382 = vmatprep.subr.bf16.mxu0 0
      %383 = vmatpush1.bf16.msra.mxu0 0
      %384 = vmatprep.subr.bf16.mxu0 0
      %385 = vmatpush1.bf16.msra.mxu0 0
      %386 = vmatprep.subr.bf16.mxu0 0
      %387 = vmatpush1.bf16.msra.mxu0 0
      %388 = vmatprep.subr.bf16.mxu0 0
      %389 = vmatpush1.bf16.msra.mxu0 0
      %390 = vmatprep.subr.bf16.mxu0 0
      %391 = vmatpush1.bf16.msra.mxu0 0
      %392 = vmatprep.subr.bf16.mxu0 0
      %393 = vmatpush1.bf16.msra.mxu0 0
      %394 = vmatprep.subr.bf16.mxu0 0
      %395 = vmatpush1.bf16.msra.mxu0 0
      %396 = vmatprep.subr.bf16.mxu0 0
      %397 = vmatpush1.bf16.msra.mxu0 0
      %398 = vmatprep.subr.bf16.mxu0 0
      %399 = vmatpush1.bf16.msra.mxu0 0
      %400 = vmatprep.subr.bf16.mxu0 0
      %401 = vmatpush1.bf16.msra.mxu0 0
      %402 = vmatprep.subr.bf16.mxu0 0
      %403 = vmatpush1.bf16.msra.mxu0 0
      %404 = vmatprep.subr.bf16.mxu0 0
      %405 = vmatpush1.bf16.msra.mxu0 0
      %406 = vmatprep.subr.bf16.mxu0 0
      %407 = vmatpush1.bf16.msra.mxu0 0
      %408 = vmatprep.subr.bf16.mxu0 0
      %409 = vmatpush1.bf16.msra.mxu0 0
      %410 = vmatprep.mubr.bf16.mxu0 0
      %411 = vmatmul.mubr.bf16.gmra.mrb[0].mxu0 %v376
      %v412 = vpop.f32.mrb[0].mxu0
      %v413 = vadd.f32 %v372, %v412
      %v414 = vpop.f32.mrb[0].mxu0
      %v415 = vpop.f32.mrb[0].mxu0
      %v416 = vpop.f32.mrb[0].mxu0
      %417 = vdwg.mxu0
      %v418 = vld [vmem:[%s353] sm:$0xff]
      %v419 = vld [vmem:[%s353 + $0x8] sm:$0xff]
      %v420 = vld [vmem:[%s353 + $0x10] sm:$0xff]
      %v421 = vpack.c.bf16 %v418, %v418
      %v422 = vld [vmem:[%s4] sm:$0xff]
      %v423 = vld [vmem:[%s4 + $0x8] sm:$0xff]
      %v424 = vld [vmem:[%s4 + $0x10] sm:$0xff]
      %v425 = vld [vmem:[%s4 + $0x18] sm:$0xff]
      %v426 = vpack.c.bf16 %v423, %v422
      %v427 = vpack.c.bf16 %v425, %v424
      %v428 = vpack.c.bf16 %v419, %v419
      %s429 = scalar_lea.vmem %s4, 32
      %v430 = vld [vmem:[%s429] sm:$0xff]
      %v431 = vld [vmem:[%s429 + $0x8] sm:$0xff]
      %v432 = vld [vmem:[%s429 + $0x10] sm:$0xff]
      %v433 = vld [vmem:[%s429 + $0x18] sm:$0xff]
      %v434 = vpack.c.bf16 %v431, %v430
      %v435 = vpack.c.bf16 %v433, %v432
      %v437 = vsel %vm374, %v428, 0
      %439 = vmatprep.subr.bf16.mxu0 0
      %440 = vmatpush1.bf16.msra.mxu0 %v434
      %441 = vmatprep.subr.bf16.mxu0 0
      %442 = vmatpush1.bf16.msra.mxu0 %v435
      %443 = vmatprep.subr.bf16.mxu0 0
      %444 = vmatpush1.bf16.msra.mxu0 0
      %445 = vmatprep.subr.bf16.mxu0 0
      %446 = vmatpush1.bf16.msra.mxu0 0
      %447 = vmatprep.subr.bf16.mxu0 0
      %448 = vmatpush1.bf16.msra.mxu0 0
      %449 = vmatprep.subr.bf16.mxu0 0
      %450 = vmatpush1.bf16.msra.mxu0 0
      %451 = vmatprep.subr.bf16.mxu0 0
      %452 = vmatpush1.bf16.msra.mxu0 0
      %453 = vmatprep.subr.bf16.mxu0 0
      %454 = vmatpush1.bf16.msra.mxu0 0
      %455 = vmatprep.subr.bf16.mxu0 0
      %456 = vmatpush1.bf16.msra.mxu0 0
      %457 = vmatprep.subr.bf16.mxu0 0
      %458 = vmatpush1.bf16.msra.mxu0 0
      %459 = vmatprep.subr.bf16.mxu0 0
      %460 = vmatpush1.bf16.msra.mxu0 0
      %461 = vmatprep.subr.bf16.mxu0 0
      %462 = vmatpush1.bf16.msra.mxu0 0
      %463 = vmatprep.subr.bf16.mxu0 0
      %464 = vmatpush1.bf16.msra.mxu0 0
      %465 = vmatprep.subr.bf16.mxu0 0
      %466 = vmatpush1.bf16.msra.mxu0 0
      %467 = vmatprep.subr.bf16.mxu0 0
      %468 = vmatpush1.bf16.msra.mxu0 0
      %469 = vmatprep.subr.bf16.mxu0 0
      %470 = vmatpush1.bf16.msra.mxu0 0
      %471 = vmatprep.mubr.bf16.mxu0 0
      %472 = vmatmul.mubr.bf16.gmra.mrb[0].mxu0 %v437
      %v473 = vpop.f32.mrb[0].mxu0
      %v474 = vadd.f32 0.0, %v473
      %v475 = vpop.f32.mrb[0].mxu0
      %v476 = vpop.f32.mrb[0].mxu0
      %v477 = vpop.f32.mrb[0].mxu0
      %478 = vdwg.mxu0
      %v480 = vsel %vm374, %v421, 0
      %482 = vmatprep.subr.bf16.mxu0 0
      %483 = vmatpush1.bf16.msra.mxu0 %v426
      %484 = vmatprep.subr.bf16.mxu0 0
      %485 = vmatpush1.bf16.msra.mxu0 %v427
      %486 = vmatprep.subr.bf16.mxu0 0
      %487 = vmatpush1.bf16.msra.mxu0 0
      %488 = vmatprep.subr.bf16.mxu0 0
      %489 = vmatpush1.bf16.msra.mxu0 0
      %490 = vmatprep.subr.bf16.mxu0 0
      %491 = vmatpush1.bf16.msra.mxu0 0
      %492 = vmatprep.subr.bf16.mxu0 0
      %493 = vmatpush1.bf16.msra.mxu0 0
      %494 = vmatprep.subr.bf16.mxu0 0
      %495 = vmatpush1.bf16.msra.mxu0 0
      %496 = vmatprep.subr.bf16.mxu0 0
      %497 = vmatpush1.bf16.msra.mxu0 0
      %498 = vmatprep.subr.bf16.mxu0 0
      %499 = vmatpush1.bf16.msra.mxu0 0
      %500 = vmatprep.subr.bf16.mxu0 0
      %501 = vmatpush1.bf16.msra.mxu0 0
      %502 = vmatprep.subr.bf16.mxu0 0
      %503 = vmatpush1.bf16.msra.mxu0 0
      %504 = vmatprep.subr.bf16.mxu0 0
      %505 = vmatpush1.bf16.msra.mxu0 0
      %506 = vmatprep.subr.bf16.mxu0 0
      %507 = vmatpush1.bf16.msra.mxu0 0
      %508 = vmatprep.subr.bf16.mxu0 0
      %509 = vmatpush1.bf16.msra.mxu0 0
      %510 = vmatprep.subr.bf16.mxu0 0
      %511 = vmatpush1.bf16.msra.mxu0 0
      %512 = vmatprep.subr.bf16.mxu0 0
      %513 = vmatpush1.bf16.msra.mxu0 0
      %514 = vmatprep.mubr.bf16.mxu0 0
      %515 = vmatmul.mubr.bf16.gmra.mrb[0].mxu0 %v480
      %v516 = vpop.f32.mrb[0].mxu0
      %v517 = vadd.f32 %v474, %v516
      %v518 = vpop.f32.mrb[0].mxu0
      %v519 = vpop.f32.mrb[0].mxu0
      %v520 = vpop.f32.mrb[0].mxu0
      %521 = vdwg.mxu0
      %v522 = vpack.c.bf16 %v420, %v420
      %s523 = scalar_lea.vmem %s4, 64
      %v524 = vld [vmem:[%s523] sm:$0xff]
      %v525 = vld [vmem:[%s523 + $0x8] sm:$0xff]
      %v526 = vld [vmem:[%s523 + $0x10] sm:$0xff]
      %v527 = vld [vmem:[%s523 + $0x18] sm:$0xff]
      %v528 = vpack.c.bf16 %v525, %v524
      %v529 = vpack.c.bf16 %v527, %v526
      %v531 = vsel %vm374, %v522, 0
      %533 = vmatprep.subr.bf16.mxu0 0
      %534 = vmatpush1.bf16.msra.mxu0 %v528
      %535 = vmatprep.subr.bf16.mxu0 0
      %536 = vmatpush1.bf16.msra.mxu0 %v529
      %537 = vmatprep.subr.bf16.mxu0 0
      %538 = vmatpush1.bf16.msra.mxu0 0
      %539 = vmatprep.subr.bf16.mxu0 0
      %540 = vmatpush1.bf16.msra.mxu0 0
      %541 = vmatprep.subr.bf16.mxu0 0
      %542 = vmatpush1.bf16.msra.mxu0 0
      %543 = vmatprep.subr.bf16.mxu0 0
      %544 = vmatpush1.bf16.msra.mxu0 0
      %545 = vmatprep.subr.bf16.mxu0 0
      %546 = vmatpush1.bf16.msra.mxu0 0
      %547 = vmatprep.subr.bf16.mxu0 0
      %548 = vmatpush1.bf16.msra.mxu0 0
      %549 = vmatprep.subr.bf16.mxu0 0
      %550 = vmatpush1.bf16.msra.mxu0 0
      %551 = vmatprep.subr.bf16.mxu0 0
      %552 = vmatpush1.bf16.msra.mxu0 0
      %553 = vmatprep.subr.bf16.mxu0 0
      %554 = vmatpush1.bf16.msra.mxu0 0
      %555 = vmatprep.subr.bf16.mxu0 0
      %556 = vmatpush1.bf16.msra.mxu0 0
      %557 = vmatprep.subr.bf16.mxu0 0
      %558 = vmatpush1.bf16.msra.mxu0 0
      %559 = vmatprep.subr.bf16.mxu0 0
      %560 = vmatpush1.bf16.msra.mxu0 0
      %561 = vmatprep.subr.bf16.mxu0 0
      %562 = vmatpush1.bf16.msra.mxu0 0
      %563 = vmatprep.subr.bf16.mxu0 0
      %564 = vmatpush1.bf16.msra.mxu0 0
      %565 = vmatprep.mubr.bf16.mxu0 0
      %566 = vmatmul.mubr.bf16.gmra.mrb[0].mxu0 %v531
      %v567 = vpop.f32.mrb[0].mxu0
      %v568 = vadd.f32 0.0, %v567
      %v569 = vpop.f32.mrb[0].mxu0
      %v570 = vpop.f32.mrb[0].mxu0
      %v571 = vpop.f32.mrb[0].mxu0
      %572 = vdwg.mxu0
      %v573 = vadd.f32 %v517, %v568
      %v574 = vld [vmem:[%s5] sm:$0x1]
      %v576 = vlaneseq
      %v577 = vshrl.u32 %v576, 7
      %v578 = vsub.s32 0, %v577
      %v579 = vrot.slane %v574, %v578
      %v581 = vadd.f32 %v573, %v579
      %v582 = vld [vmem:[%s6] sm:$0xff]
      %v583 = vld [vmem:[%s6 + $0x8] sm:$0xff]
      %v584 = vld [vmem:[%s6 + $0x10] sm:$0xff]
      %v585 = vld [vmem:[%s6 + $0x18] sm:$0xff]
      %v586 = vpack.c.bf16 %v583, %v582
      %v587 = vpack.c.bf16 %v585, %v584
      %v588 = vld [vmem:[%s7] sm:$0x1]
      %v590 = vlaneseq
      %v591 = vshrl.u32 %v590, 7
      %v592 = vsub.s32 0, %v591
      %v593 = vrot.slane %v588, %v592
      %595 = vmatprep.subr.bf16.mxu0 0
      %596 = vmatpush1.bf16.msra.mxu0 %v586
      %597 = vmatprep.subr.bf16.mxu0 0
      %598 = vmatpush1.bf16.msra.mxu0 %v587
      %599 = vmatprep.subr.bf16.mxu0 0
      %600 = vmatpush1.bf16.msra.mxu0 0
      %601 = vmatprep.subr.bf16.mxu0 0
      %602 = vmatpush1.bf16.msra.mxu0 0
      %603 = vmatprep.subr.bf16.mxu0 0
      %604 = vmatpush1.bf16.msra.mxu0 0
      %605 = vmatprep.subr.bf16.mxu0 0
      %606 = vmatpush1.bf16.msra.mxu0 0
      %607 = vmatprep.subr.bf16.mxu0 0
      %608 = vmatpush1.bf16.msra.mxu0 0
      %609 = vmatprep.subr.bf16.mxu0 0
      %610 = vmatpush1.bf16.msra.mxu0 0
      %611 = vmatprep.subr.bf16.mxu0 0
      %612 = vmatpush1.bf16.msra.mxu0 0
      %613 = vmatprep.subr.bf16.mxu0 0
      %614 = vmatpush1.bf16.msra.mxu0 0
      %615 = vmatprep.subr.bf16.mxu0 0
      %616 = vmatpush1.bf16.msra.mxu0 0
      %617 = vmatprep.subr.bf16.mxu0 0
      %618 = vmatpush1.bf16.msra.mxu0 0
      %619 = vmatprep.subr.bf16.mxu0 0
      %620 = vmatpush1.bf16.msra.mxu0 0
      %621 = vmatprep.subr.bf16.mxu0 0
      %622 = vmatpush1.bf16.msra.mxu0 0
      %623 = vmatprep.subr.bf16.mxu0 0
      %624 = vmatpush1.bf16.msra.mxu0 0
      %625 = vmatprep.subr.bf16.mxu0 0
      %626 = vmatpush1.bf16.msra.mxu0 0
      %627 = vmatprep.mubr.bf16.mxu0 0
      %628 = vmatmul.mubr.bf16.gmra.mrb[0].mxu0 %v437
      %v629 = vpop.f32.mrb[0].mxu0
      %v630 = vadd.f32 %v593, %v629
      %v631 = vpop.f32.mrb[0].mxu0
      %v632 = vpop.f32.mrb[0].mxu0
      %v633 = vpop.f32.mrb[0].mxu0
      %634 = vdwg.mxu0
      %s635 = scalar_lea.vmem %s6, 32
      %v636 = vld [vmem:[%s635] sm:$0xff]
      %v637 = vld [vmem:[%s635 + $0x8] sm:$0xff]
      %v638 = vld [vmem:[%s635 + $0x10] sm:$0xff]
      %v639 = vld [vmem:[%s635 + $0x18] sm:$0xff]
      %v640 = vpack.c.bf16 %v637, %v636
      %v641 = vpack.c.bf16 %v639, %v638
      %s642 = scalar_lea.vmem %s7, 1
      %v643 = vld [vmem:[%s642] sm:$0x1]
      %v645 = vlaneseq
      %v646 = vshrl.u32 %v645, 7
      %v647 = vsub.s32 0, %v646
      %v648 = vrot.slane %v643, %v647
      %650 = vmatprep.subr.bf16.mxu0 0
      %651 = vmatpush1.bf16.msra.mxu0 %v640
      %652 = vmatprep.subr.bf16.mxu0 0
      %653 = vmatpush1.bf16.msra.mxu0 %v641
      %654 = vmatprep.subr.bf16.mxu0 0
      %655 = vmatpush1.bf16.msra.mxu0 0
      %656 = vmatprep.subr.bf16.mxu0 0
      %657 = vmatpush1.bf16.msra.mxu0 0
      %658 = vmatprep.subr.bf16.mxu0 0
      %659 = vmatpush1.bf16.msra.mxu0 0
      %660 = vmatprep.subr.bf16.mxu0 0
      %661 = vmatpush1.bf16.msra.mxu0 0
      %662 = vmatprep.subr.bf16.mxu0 0
      %663 = vmatpush1.bf16.msra.mxu0 0
      %664 = vmatprep.subr.bf16.mxu0 0
      %665 = vmatpush1.bf16.msra.mxu0 0
      %666 = vmatprep.subr.bf16.mxu0 0
      %667 = vmatpush1.bf16.msra.mxu0 0
      %668 = vmatprep.subr.bf16.mxu0 0
      %669 = vmatpush1.bf16.msra.mxu0 0
      %670 = vmatprep.subr.bf16.mxu0 0
      %671 = vmatpush1.bf16.msra.mxu0 0
      %672 = vmatprep.subr.bf16.mxu0 0
      %673 = vmatpush1.bf16.msra.mxu0 0
      %674 = vmatprep.subr.bf16.mxu0 0
      %675 = vmatpush1.bf16.msra.mxu0 0
      %676 = vmatprep.subr.bf16.mxu0 0
      %677 = vmatpush1.bf16.msra.mxu0 0
      %678 = vmatprep.subr.bf16.mxu0 0
      %679 = vmatpush1.bf16.msra.mxu0 0
      %680 = vmatprep.subr.bf16.mxu0 0
      %681 = vmatpush1.bf16.msra.mxu0 0
      %682 = vmatprep.mubr.bf16.mxu0 0
      %683 = vmatmul.mubr.bf16.gmra.mrb[0].mxu0 %v531
      %v684 = vpop.f32.mrb[0].mxu0
      %v685 = vadd.f32 %v648, %v684
      %v686 = vpop.f32.mrb[0].mxu0
      %v687 = vpop.f32.mrb[0].mxu0
      %v688 = vpop.f32.mrb[0].mxu0
      %689 = vdwg.mxu0
      %v690 = vpack.c.bf16 %v581, %v581
      %v691 = vld [vmem:[%s8] sm:$0xff]
      %v692 = vld [vmem:[%s8 + $0x8] sm:$0xff]
      %v693 = vld [vmem:[%s8 + $0x10] sm:$0xff]
      %v694 = vld [vmem:[%s8 + $0x18] sm:$0xff]
      %v695 = vpack.c.bf16 %v692, %v691
      %v696 = vpack.c.bf16 %v694, %v693
      %v697 = vld [vmem:[%s9] sm:$0x1]
      %v699 = vlaneseq
      %v700 = vshrl.u32 %v699, 7
      %v701 = vsub.s32 0, %v700
      %v702 = vrot.slane %v697, %v701
      %v705 = vsel %vm374, %v690, 0
      %707 = vmatprep.subr.bf16.mxu0 0
      %708 = vmatpush1.bf16.msra.mxu0 %v695
      %709 = vmatprep.subr.bf16.mxu0 0
      %710 = vmatpush1.bf16.msra.mxu0 %v696
      %711 = vmatprep.subr.bf16.mxu0 0
      %712 = vmatpush1.bf16.msra.mxu0 0
      %713 = vmatprep.subr.bf16.mxu0 0
      %714 = vmatpush1.bf16.msra.mxu0 0
      %715 = vmatprep.subr.bf16.mxu0 0
      %716 = vmatpush1.bf16.msra.mxu0 0
      %717 = vmatprep.subr.bf16.mxu0 0
      %718 = vmatpush1.bf16.msra.mxu0 0
      %719 = vmatprep.subr.bf16.mxu0 0
      %720 = vmatpush1.bf16.msra.mxu0 0
      %721 = vmatprep.subr.bf16.mxu0 0
      %722 = vmatpush1.bf16.msra.mxu0 0
      %723 = vmatprep.subr.bf16.mxu0 0
      %724 = vmatpush1.bf16.msra.mxu0 0
      %725 = vmatprep.subr.bf16.mxu0 0
      %726 = vmatpush1.bf16.msra.mxu0 0
      %727 = vmatprep.subr.bf16.mxu0 0
      %728 = vmatpush1.bf16.msra.mxu0 0
      %729 = vmatprep.subr.bf16.mxu0 0
      %730 = vmatpush1.bf16.msra.mxu0 0
      %731 = vmatprep.subr.bf16.mxu0 0
      %732 = vmatpush1.bf16.msra.mxu0 0
      %733 = vmatprep.subr.bf16.mxu0 0
      %734 = vmatpush1.bf16.msra.mxu0 0
      %735 = vmatprep.subr.bf16.mxu0 0
      %736 = vmatpush1.bf16.msra.mxu0 0
      %737 = vmatprep.subr.bf16.mxu0 0
      %738 = vmatpush1.bf16.msra.mxu0 0
      %739 = vmatprep.mubr.bf16.mxu0 0
      %740 = vmatmul.mubr.bf16.gmra.mrb[0].mxu0 %v705
      %v741 = vpop.f32.mrb[0].mxu0
      %v742 = vadd.f32 %v702, %v741
      %v743 = vpop.f32.mrb[0].mxu0
      %v744 = vpop.f32.mrb[0].mxu0
      %v745 = vpop.f32.mrb[0].mxu0
      %746 = vdwg.mxu0
      %v747 = vxor.u32 %v742, 2147483648
      %v748 = vmul.f32 %v747, 1.442695
      %v749 = vpow.pop %v748
      %v750 = vadd.f32 %v749, 1.0
      %v751 = vrcp.pop %v750
      %v752 = vmul.f32 1.0, %v751
      %v753 = vmul.f32 %v752, %v413
      %v754 = vsel %vm374, %v753, 0.0
      %755 = vadd.xlane.f32.xlu0 %v754
      %v756 = vpop.xlane.xlu0 %755
      %v757 = vadd.f32 %v756, 0.0
      %v758 = vpack.c.bf16 %v630, %v630
      %s759 = scalar_lea.vmem %s8, 32
      %v760 = vld [vmem:[%s759] sm:$0xff]
      %v761 = vld [vmem:[%s759 + $0x8] sm:$0xff]
      %v762 = vld [vmem:[%s759 + $0x10] sm:$0xff]
      %v763 = vld [vmem:[%s759 + $0x18] sm:$0xff]
      %v764 = vpack.c.bf16 %v761, %v760
      %v765 = vpack.c.bf16 %v763, %v762
      %s766 = scalar_lea.vmem %s9, 1
      %v767 = vld [vmem:[%s766] sm:$0x1]
      %v769 = vlaneseq
      %v770 = vshrl.u32 %v769, 7
      %v771 = vsub.s32 0, %v770
      %v772 = vrot.slane %v767, %v771
      %v775 = vsel %vm374, %v758, 0
      %777 = vmatprep.subr.bf16.mxu0 0
      %778 = vmatpush1.bf16.msra.mxu0 %v764
      %779 = vmatprep.subr.bf16.mxu0 0
      %780 = vmatpush1.bf16.msra.mxu0 %v765
      %781 = vmatprep.subr.bf16.mxu0 0
      %782 = vmatpush1.bf16.msra.mxu0 0
      %783 = vmatprep.subr.bf16.mxu0 0
      %784 = vmatpush1.bf16.msra.mxu0 0
      %785 = vmatprep.subr.bf16.mxu0 0
      %786 = vmatpush1.bf16.msra.mxu0 0
      %787 = vmatprep.subr.bf16.mxu0 0
      %788 = vmatpush1.bf16.msra.mxu0 0
      %789 = vmatprep.subr.bf16.mxu0 0
      %790 = vmatpush1.bf16.msra.mxu0 0
      %791 = vmatprep.subr.bf16.mxu0 0
      %792 = vmatpush1.bf16.msra.mxu0 0
      %793 = vmatprep.subr.bf16.mxu0 0
      %794 = vmatpush1.bf16.msra.mxu0 0
      %795 = vmatprep.subr.bf16.mxu0 0
      %796 = vmatpush1.bf16.msra.mxu0 0
      %797 = vmatprep.subr.bf16.mxu0 0
      %798 = vmatpush1.bf16.msra.mxu0 0
      %799 = vmatprep.subr.bf16.mxu0 0
      %800 = vmatpush1.bf16.msra.mxu0 0
      %801 = vmatprep.subr.bf16.mxu0 0
      %802 = vmatpush1.bf16.msra.mxu0 0
      %803 = vmatprep.subr.bf16.mxu0 0
      %804 = vmatpush1.bf16.msra.mxu0 0
      %805 = vmatprep.subr.bf16.mxu0 0
      %806 = vmatpush1.bf16.msra.mxu0 0
      %807 = vmatprep.subr.bf16.mxu0 0
      %808 = vmatpush1.bf16.msra.mxu0 0
      %809 = vmatprep.mubr.bf16.mxu0 0
      %810 = vmatmul.mubr.bf16.gmra.mrb[0].mxu0 %v775
      %v811 = vpop.f32.mrb[0].mxu0
      %v812 = vadd.f32 %v772, %v811
      %v813 = vpop.f32.mrb[0].mxu0
      %v814 = vpop.f32.mrb[0].mxu0
      %v815 = vpop.f32.mrb[0].mxu0
      %816 = vdwg.mxu0
      %v817 = vxor.u32 %v812, 2147483648
      %v818 = vmul.f32 %v817, 1.442695
      %v819 = vpow.pop %v818
      %v820 = vadd.f32 %v819, 1.0
      %v821 = vrcp.pop %v820
      %v822 = vmul.f32 1.0, %v821
      %v823 = vmul.f32 %v822, %v413
      %v824 = vsel %vm374, %v823, 0.0
      %825 = vadd.xlane.f32.xlu0 %v824
      %v826 = vpop.xlane.xlu0 %825
      %v827 = vadd.f32 %v757, %v826
      %v828 = vpack.c.bf16 %v685, %v685
      %s829 = scalar_lea.vmem %s8, 64
      %v830 = vld [vmem:[%s829] sm:$0xff]
      %v831 = vld [vmem:[%s829 + $0x8] sm:$0xff]
      %v832 = vld [vmem:[%s829 + $0x10] sm:$0xff]
      %v833 = vld [vmem:[%s829 + $0x18] sm:$0xff]
      %v834 = vpack.c.bf16 %v831, %v830
      %v835 = vpack.c.bf16 %v833, %v832
      %s836 = scalar_lea.vmem %s9, 2
      %v837 = vld [vmem:[%s836] sm:$0x1]
      %v839 = vlaneseq
      %v840 = vshrl.u32 %v839, 7
      %v841 = vsub.s32 0, %v840
      %v842 = vrot.slane %v837, %v841
      %v845 = vsel %vm374, %v828, 0
      %847 = vmatprep.subr.bf16.mxu0 0
      %848 = vmatpush1.bf16.msra.mxu0 %v834
      %849 = vmatprep.subr.bf16.mxu0 0
      %850 = vmatpush1.bf16.msra.mxu0 %v835
      %851 = vmatprep.subr.bf16.mxu0 0
      %852 = vmatpush1.bf16.msra.mxu0 0
      %853 = vmatprep.subr.bf16.mxu0 0
      %854 = vmatpush1.bf16.msra.mxu0 0
      %855 = vmatprep.subr.bf16.mxu0 0
      %856 = vmatpush1.bf16.msra.mxu0 0
      %857 = vmatprep.subr.bf16.mxu0 0
      %858 = vmatpush1.bf16.msra.mxu0 0
      %859 = vmatprep.subr.bf16.mxu0 0
      %860 = vmatpush1.bf16.msra.mxu0 0
      %861 = vmatprep.subr.bf16.mxu0 0
      %862 = vmatpush1.bf16.msra.mxu0 0
      %863 = vmatprep.subr.bf16.mxu0 0
      %864 = vmatpush1.bf16.msra.mxu0 0
      %865 = vmatprep.subr.bf16.mxu0 0
      %866 = vmatpush1.bf16.msra.mxu0 0
      %867 = vmatprep.subr.bf16.mxu0 0
      %868 = vmatpush1.bf16.msra.mxu0 0
      %869 = vmatprep.subr.bf16.mxu0 0
      %870 = vmatpush1.bf16.msra.mxu0 0
      %871 = vmatprep.subr.bf16.mxu0 0
      %872 = vmatpush1.bf16.msra.mxu0 0
      %873 = vmatprep.subr.bf16.mxu0 0
      %874 = vmatpush1.bf16.msra.mxu0 0
      %875 = vmatprep.subr.bf16.mxu0 0
      %876 = vmatpush1.bf16.msra.mxu0 0
      %877 = vmatprep.subr.bf16.mxu0 0
      %878 = vmatpush1.bf16.msra.mxu0 0
      %879 = vmatprep.mubr.bf16.mxu0 0
      %880 = vmatmul.mubr.bf16.gmra.mrb[0].mxu0 %v845
      %v881 = vpop.f32.mrb[0].mxu0
      %v882 = vadd.f32 %v842, %v881
      %v883 = vpop.f32.mrb[0].mxu0
      %v884 = vpop.f32.mrb[0].mxu0
      %v885 = vpop.f32.mrb[0].mxu0
      %886 = vdwg.mxu0
      %v887 = vxor.u32 %v882, 2147483648
      %v888 = vmul.f32 %v887, 1.442695
      %v889 = vpow.pop %v888
      %v890 = vadd.f32 %v889, 1.0
      %v891 = vrcp.pop %v890
      %v892 = vmul.f32 1.0, %v891
      %v893 = vmul.f32 %v892, %v413
      %v894 = vsel %vm374, %v893, 0.0
      %895 = vadd.xlane.f32.xlu0 %v894
      %v896 = vpop.xlane.xlu0 %895
      %v897 = vadd.f32 %v827, %v896
      %vm898 = vcmask 7168
      %v899 = vsel %vm898, %v757, %v827
      %vm900 = vcmask 15360
      %v901 = vsel %vm900, %v899, %v897
      %vm902 = vcmask 23552
      %903 = vst.msk [vmem:[%s357] sm:$0xff] %vm902, %v901
      %p904 = scmp.lt.s32.totalorder %s21, 1
      %s905 = scalar_select %p904, %s21, 1
      %s906 = smul.addr %s905, 8
      %s907 = scalar_lea.vmem %s10, %s906
      // Predicated region
      $region61: #{fe_forward.1} parent=59 // pred_check
        %p908 = pneg %p254
      $region62: #{fe_forward.1} parent=59 // pred_check_branch
        %910 = sbr.rel (%p908) target = $region64
      $region63: #{fe_forward.1} parent=59 // pred_region
        _
      $region64: #{fe_forward.1} parent=59 // pred_fallthru
        _
    $region60: #{fe_forward.1} parent=5 // pred_fallthru
      _
    %p911 = scmp.le.s32.totalorder 2, %s16
    // Predicated region
    $region65: #{fe_forward.1} parent=5 // pred_check
      %p912 = pneg %p911
    $region66: #{fe_forward.1} parent=5 // pred_check_branch
      %914 = sbr.rel (%p912) target = $region68
    $region67: #{fe_forward.1} parent=5 // pred_region
      %s915 = ssub.s32 %s16, 2
      // Predicated region
      $region69: #{fe_forward.1} parent=67 // pred_check
        %p916 = pneg %p260
      $region70: #{fe_forward.1} parent=67 // pred_check_branch
        %918 = sbr.rel (%p916) target = $region72
      $region71: #{fe_forward.1} parent=67 // pred_region
        %p919 = scmp.lt.s32.totalorder %s22, 1
        %s920 = scalar_select %p919, %s22, 1
        %s921 = smul.addr %s920, 8
        %s922 = scalar_lea.vmem %s10, %s921
      $region72: #{fe_forward.1} parent=67 // pred_fallthru
        _
    $region68: #{fe_forward.1} parent=5 // pred_fallthru
      _
  $region6: #{fe_forward.1} parent=0 // loop_footer
    %s20 = sadd.s32 1, %s16
  $region7: #{fe_forward.1} parent=0 // loop_footer_branch
    %15 = sbr.rel target = $region3
  $region8: #{fe_forward.1} parent=0 // loop_exit
    _

</llo_original>
